<compile_context>
chip_gen: v7x
topology: tpu7x:2x2x1
jax: 0.10.0
libtpu: 0.0.40
codegen_flags: <defaults>
</compile_context>

<pallas_src>
import functools

import jax
import jax.numpy as jnp
from jax.experimental import pallas as pl
from jax.experimental.pallas import tpu as pltpu

_LANE = 128          # pad the output dim to this for lane-dense stores
_BATCH_BLOCK = 1024  # batch tile used only when B is large


def _round_up(n, m):
    return ((n + m - 1) // m) * m


def _fused_kernel(x_ref, w_ref, b_ref, o_ref):
    # One MXU contraction: out = x @ W + b (f32 accumulate, cast at the end).
    acc = jnp.dot(x_ref[...], w_ref[...], preferred_element_type=jnp.float32)
    acc = acc + b_ref[...].astype(jnp.float32)
    o_ref[...] = acc.astype(o_ref.dtype)


@functools.partial(jax.jit, static_argnames=("out_dim",))
def _fused_linear(x, w, b, *, out_dim):
    """x: [B, K], w: [K, O_pad] (O_pad % 128 == 0), b: [1, O_pad] -> [B, out_dim]."""
    B, K = x.shape
    o_pad = w.shape[1]

    if B > _BATCH_BLOCK and B % _BATCH_BLOCK == 0:
        # Large batch: tile rows; "parallel" lets v7x split the grid over 2 TCs.
        out = pl.pallas_call(
            _fused_kernel,
            out_shape=jax.ShapeDtypeStruct((B, o_pad), x.dtype),
            grid=(B // _BATCH_BLOCK,),
            in_specs=[
                pl.BlockSpec((_BATCH_BLOCK, K), lambda i: (i, 0)),
                pl.BlockSpec((K, o_pad), lambda i: (0, 0)),
                pl.BlockSpec((1, o_pad), lambda i: (0, 0)),
            ],
            out_specs=pl.BlockSpec((_BATCH_BLOCK, o_pad), lambda i: (i, 0)),
            compiler_params=pltpu.CompilerParams(
                dimension_semantics=("parallel",)),
        )(x, w, b)
    else:
        # Small batch: no grid -> no pipeline prologue/epilogue; whole operands
        # resident in VMEM for a single kernel invocation.
        vmem = pl.BlockSpec(memory_space=pltpu.MemorySpace.VMEM)
        out = pl.pallas_call(
            _fused_kernel,
            out_shape=jax.ShapeDtypeStruct((B, o_pad), x.dtype),
            in_specs=[vmem, vmem, vmem],
            out_specs=vmem,
        )(x, w, b)

    return out[:, :out_dim]


def make_linear_model_params(key, n_features, n_actions, n_additional,
                             use_bias=True, init_identity=False,
                             dtype=jnp.float32):
    """Synthetic init matching nn.Linear shapes; weights pre-packed for the kernel.

    Packed layout (done once, offline):
      W_* : [F + A, O_pad]   rows 0..F-1 = Wf^T, rows F..F+A-1 = Wa^T,
                             columns >= O are zero padding (O_pad % 128 == 0)
      b_* : [1, O_pad]
    "W_all"/"b_all" hold [main | additional] output columns so all=True is one call.
    """
    ks = jax.random.split(key, 6)
    F, A, ADD = n_features, n_actions, n_additional
    K = F + A

    def uniform(k, shape, fan_in):
        bound = 1.0 / jnp.sqrt(jnp.asarray(fan_in, jnp.float32))
        return jax.random.uniform(k, shape, dtype, -bound, bound)

    wf = uniform(ks[0], (F, F), F)      # [out, in] like nn.Linear
    wa = uniform(ks[1], (F, A), A)
    if init_identity:
        wf = jnp.eye(F, dtype=dtype)
        wa = jnp.eye(F, A, dtype=dtype)  # rectangular eye, as in the torch module
    bf = uniform(ks[2], (F,), F) if use_bias else jnp.zeros((F,), dtype)

    def pack(w_feat_T, w_act_T, bias, out_dim):
        o_pad = _round_up(max(out_dim, 1), _LANE)
        w = jnp.zeros((K, o_pad), dtype)
        w = w.at[:F, :out_dim].set(w_feat_T)
        w = w.at[F:, :out_dim].set(w_act_T)
        b = jnp.zeros((1, o_pad), dtype).at[0, :out_dim].set(bias)
        return w, b

    w_main, b_main = pack(wf.T, wa.T, bf, F)
    params = {
        "W_main": w_main, "b_main": b_main, "out_main": F,
        # Raw (transposed) weights kept only for reference checks / inspection.
        "fc_features.weight_T": wf.T,
        "fc_action.weight_T": wa.T,
        "fc_features.bias": bf,
    }

    if ADD:
        wfa = uniform(ks[3], (ADD, F), F)
        waa = uniform(ks[4], (ADD, A), A)
        bfa = uniform(ks[5], (ADD,), F) if use_bias else jnp.zeros((ADD,), dtype)
        w_add, b_add = pack(wfa.T, waa.T, bfa, ADD)
        w_all, b_all = pack(jnp.concatenate([wf.T, wfa.T], axis=1),
                            jnp.concatenate([wa.T, waa.T], axis=1),
                            jnp.concatenate([bf, bfa]), F + ADD)
        params.update({
            "W_add": w_add, "b_add": b_add, "out_add": ADD,
            "W_all": w_all, "b_all": b_all, "out_all": F + ADD,
            "fc_features_additional.weight_T": wfa.T,
            "fc_action_additional.weight_T": waa.T,
            "fc_features_additional.bias": bfa,
        })
    return params


def linear_model_forward(params, f_t, a_t, additional=False, all=False):
    """Mirrors LinearModel.forward: one fused pallas_call per call, any mode."""
    x = jnp.concatenate([f_t, a_t], axis=1)  # [B, F+A]: single contraction dim
    if all:
        return _fused_linear(x, params["W_all"], params["b_all"],
                             out_dim=params["out_all"])
    if additional:
        return _fused_linear(x, params["W_add"], params["b_add"],
                             out_dim=params["out_add"])
    return _fused_linear(x, params["W_main"], params["b_main"],
                         out_dim=params["out_main"])


if __name__ == "__main__":
    B, F, A, ADD = 8, 32, 8, 16
    key = jax.random.PRNGKey(0)
    kp, kf, ka = jax.random.split(key, 3)

    params = make_linear_model_params(kp, F, A, ADD, use_bias=True)
    f_t = jax.random.normal(kf, (B, F), jnp.float32)
    a_t = jax.random.normal(ka, (B, A), jnp.float32)

    out_main = jax.block_until_ready(linear_model_forward(params, f_t, a_t))
    out_add = jax.block_until_ready(
        linear_model_forward(params, f_t, a_t, additional=True))
    out_all = jax.block_until_ready(
        linear_model_forward(params, f_t, a_t, all=True))

    # Reference check against plain JAX (same math as nn.Linear).
    ref_main = (f_t @ params["fc_features.weight_T"]
                + params["fc_features.bias"]
                + a_t @ params["fc_action.weight_T"])
    ref_add = (f_t @ params["fc_features_additional.weight_T"]
               + params["fc_features_additional.bias"]
               + a_t @ params["fc_action_additional.weight_T"])
    ref_all = jnp.concatenate([ref_main, ref_add], axis=1)

    assert out_main.shape == (B, F)
    assert out_add.shape == (B, ADD)
    assert out_all.shape == (B, F + ADD)
    assert jnp.allclose(out_main, ref_main, atol=1e-5)
    assert jnp.allclose(out_add, ref_add, atol=1e-5)
    assert jnp.allclose(out_all, ref_all, atol=1e-5)

    print("KERNEL_OK")
</pallas_src>

<mosaic_0001>
module attributes {stable_mosaic.version = 11 : i64} {
  func.func @_fused_kernel(%arg0: memref<8x40xf32, #tpu.memory_space<vmem>>, %arg1: memref<40x128xf32, #tpu.memory_space<vmem>>, %arg2: memref<1x128xf32, #tpu.memory_space<vmem>>, %arg3: memref<8x128xf32, #tpu.memory_space<vmem>>) attributes {dimension_semantics = [], scalar_prefetch = 0 : i64, scratch_operands = 0 : i64, tpu.core_type = #tpu.core_type<tc>} {
    %c0 = arith.constant 0 : index
    %c0_0 = arith.constant 0 : index
    %0 = vector.load %arg0[%c0, %c0_0] : memref<8x40xf32, #tpu.memory_space<vmem>>, vector<8x40xf32>
    %c0_1 = arith.constant 0 : index
    %c0_2 = arith.constant 0 : index
    %1 = vector.load %arg1[%c0_1, %c0_2] : memref<40x128xf32, #tpu.memory_space<vmem>>, vector<40x128xf32>
    %cst = arith.constant dense<0.000000e+00> : vector<8x128xf32>
    %2 = tpu.matmul %0, %1, %cst {dimension_numbers = #tpu.dot_dimension_numbers<[1], [0], [0], [1], [0, 0, 1, 1], [], []>} : vector<8x40xf32>, vector<40x128xf32>, vector<8x128xf32> -> vector<8x128xf32>
    %c0_3 = arith.constant 0 : index
    %c0_4 = arith.constant 0 : index
    %3 = vector.load %arg2[%c0_3, %c0_4] : memref<1x128xf32, #tpu.memory_space<vmem>>, vector<1x128xf32>
    %4 = vector.broadcast %3 : vector<1x128xf32> to vector<8x128xf32>
    %5 = arith.addf %2, %4 : vector<8x128xf32>
    %c0_5 = arith.constant 0 : index
    %c0_6 = arith.constant 0 : index
    %6 = vector.load %arg3[%c0_5, %c0_6] : memref<8x128xf32, #tpu.memory_space<vmem>>, vector<8x128xf32>
    tpu.vector_store %arg3[%c0_5, %c0_6], %5 {strides = array<i32>} : memref<8x128xf32, #tpu.memory_space<vmem>>, vector<8x128xf32>,
    return
  }
}

</mosaic_0001>

<llo_original>
// kernel: _fused_linear.1
$region0: #{_fused_linear.1}
  #allocation0 [shape = 'u32[]', space=smem, size = 0x4, offset = 0x4, fixed_abs, tag = 'smem constant byte address 0x4 - core index']
  #allocation1 [shape = 'u32[144,128]{1,0:T(1,128)}', space=vmem, size = 0x12000, scoped, tag = 'internal scratch']
  %s0 = inlined_call_operand.hbm [shape: f32[8,40], index: 0, kind: input, shape index: {}]
  %s1 = inlined_call_operand.hbm [shape: f32[40,128], index: 1, kind: input, shape index: {}]
  %s2 = inlined_call_operand.vmem [shape: f32[1,128], index: 2, kind: input, shape index: {}]
  %s3 = inlined_call_operand.hbm [shape: f32[8,128], index: 3, kind: output, shape index: {}]
  %s4 = sld [smem:[#allocation0]]
  $region30: #{_fused_linear.1} parent=0
    _
  %s6 = ssub.s32 1, %s4
  %s7 = scalar_select 0, %s6, %s4
  $region1: #{_fused_linear.1} parent=0
    #allocation2 [shape = 'u8[4096]{0}', space=vmem, size = 0x1000, scoped, tag = 'input window, operand 0, single buffered']
    #allocation3 [shape = 's32[1]{0}', space=sflag, size = 0x4, scoped, tag = 'scoped memory for _fused_linear.1']
    #allocation4 [shape = 's32[1]{0}', space=sflag, size = 0x4, scoped, tag = 'scoped memory for _fused_linear.1']
    #allocation5 [shape = 'u8[20480]{0}', space=vmem, size = 0x5000, scoped, tag = 'input window, operand 1, single buffered']
    #allocation6 [shape = 's32[1]{0}', space=sflag, size = 0x4, scoped, tag = 'scoped memory for _fused_linear.1']
    #allocation7 [shape = 'u8[4096]{0}', space=vmem, size = 0x1000, scoped, tag = 'output window, operand 0, single buffered']
    %8 = vsyncpa [#allocation3], 0
    %9 = vsyncpa [#allocation6], 0
    %10 = vsyncpa [#allocation4], 0
    // Predicated region
    $region2: #{_fused_linear.1} parent=1 // pred_check
      _
    $region3: #{_fused_linear.1} parent=1 // pred_check_branch
      %12 = sbr.rel (0) target = $region5
    $region4: #{_fused_linear.1} parent=1 // pred_region
      %s14 = ssub.s32 128, 128
      %15 = vsyncadd [#allocation3], %s14
      %s17 = sshll.u32 [#allocation2], 4
      %s18 = int_to_ptr.vmem [resolvable:$true] %s17
      %20 = dma.hbm_to_vmem [thread:$0]  %s0, 128, %s18, [#allocation3]
    $region5: #{_fused_linear.1} parent=1 // pred_fallthru
      _
    // Predicated region
    $region6: #{_fused_linear.1} parent=1 // pred_check
      _
    $region7: #{_fused_linear.1} parent=1 // pred_check_branch
      %22 = sbr.rel (0) target = $region9
    $region8: #{_fused_linear.1} parent=1 // pred_region
      %s24 = ssub.s32 640, 640
      %25 = vsyncadd [#allocation6], %s24
      %s26 = sshll.u32 [#allocation5], 4
      %s27 = int_to_ptr.vmem [resolvable:$true] %s26
      %32 = dma.hbm_to_vmem [thread:$0]  %s1, 640, %s27, [#allocation6], 128, 128, 8
    $region9: #{_fused_linear.1} parent=1 // pred_fallthru
      _
    // Predicated region
    $region10: #{_fused_linear.1} parent=1 // pred_check
      _
    $region11: #{_fused_linear.1} parent=1 // pred_check_branch
      %34 = sbr.rel (0) target = $region13
    $region12: #{_fused_linear.1} parent=1 // pred_region
      _
    $region13: #{_fused_linear.1} parent=1 // pred_fallthru
      _
    // Predicated region
    $region14: #{_fused_linear.1} parent=1 // pred_check
      _
    $region15: #{_fused_linear.1} parent=1 // pred_check_branch
      %36 = sbr.rel (0) target = $region17
    $region16: #{_fused_linear.1} parent=1 // pred_region
      %37 = dma.done [#allocation3], 128
    $region17: #{_fused_linear.1} parent=1 // pred_fallthru
      _
    // Predicated region
    $region18: #{_fused_linear.1} parent=1 // pred_check
      _
    $region19: #{_fused_linear.1} parent=1 // pred_check_branch
      %39 = sbr.rel (0) target = $region21
    $region20: #{_fused_linear.1} parent=1 // pred_region
      %40 = dma.done [#allocation6], 640
    $region21: #{_fused_linear.1} parent=1 // pred_fallthru
      _
    %v41 = vld [vmem:[#allocation2] sm:$0xff]
    %v42 = vld [vmem:[#allocation5] sm:$0xff]
    %v43 = vld [vmem:[#allocation5 + $0x8] sm:$0xff]
    %v44 = vld [vmem:[#allocation5 + $0x10] sm:$0xff]
    %v45 = vld [vmem:[#allocation5 + $0x18] sm:$0xff]
    %v46 = vld [vmem:[#allocation5 + $0x20] sm:$0xff]
    %v47 = vld [vmem:[%s2] sm:$0x1]
    %v49 = vlaneseq
    %v50 = vshrl.u32 %v49, 7
    %v51 = vsub.s32 0, %v50
    %v52 = vrot.slane %v47, %v51
    %vm54 = vcmask 326656
    %v56 = vsel %vm54, %v41, 0
    %58 = vmatprep.subr.mxu0 0.0
    %59 = vmatpush1.msra.mxu0 %v42
    %60 = vmatprep.subr.mxu0 0.0
    %61 = vmatpush1.msra.mxu0 %v43
    %62 = vmatprep.subr.mxu0 0.0
    %63 = vmatpush1.msra.mxu0 %v44
    %64 = vmatprep.subr.mxu0 0.0
    %65 = vmatpush1.msra.mxu0 %v45
    %66 = vmatprep.subr.mxu0 0.0
    %67 = vmatpush1.msra.mxu0 %v46
    %68 = vmatprep.subr.mxu0 0.0
    %69 = vmatpush1.msra.mxu0 0.0
    %70 = vmatprep.subr.mxu0 0.0
    %71 = vmatpush1.msra.mxu0 0.0
    %72 = vmatprep.subr.mxu0 0.0
    %73 = vmatpush1.msra.mxu0 0.0
    %74 = vmatprep.subr.mxu0 0.0
    %75 = vmatpush1.msra.mxu0 0.0
    %76 = vmatprep.subr.mxu0 0.0
    %77 = vmatpush1.msra.mxu0 0.0
    %78 = vmatprep.subr.mxu0 0.0
    %79 = vmatpush1.msra.mxu0 0.0
    %80 = vmatprep.subr.mxu0 0.0
    %81 = vmatpush1.msra.mxu0 0.0
    %82 = vmatprep.subr.mxu0 0.0
    %83 = vmatpush1.msra.mxu0 0.0
    %84 = vmatprep.subr.mxu0 0.0
    %85 = vmatpush1.msra.mxu0 0.0
    %86 = vmatprep.subr.mxu0 0.0
    %87 = vmatpush1.msra.mxu0 0.0
    %88 = vmatprep.subr.mxu0 0.0
    %89 = vmatpush1.msra.mxu0 0.0
    %90 = vmatprep.subr.mxu0 0.0
    %91 = vmatpush1.msra.mxu0 0.0
    %92 = vmatprep.subr.mxu0 0.0
    %93 = vmatpush1.msra.mxu0 0.0
    %94 = vmatprep.subr.mxu0 0.0
    %95 = vmatpush1.msra.mxu0 0.0
    %96 = vmatprep.subr.mxu0 0.0
    %97 = vmatpush1.msra.mxu0 0.0
    %98 = vmatprep.subr.mxu0 0.0
    %99 = vmatpush1.msra.mxu0 0.0
    %100 = vmatprep.subr.mxu0 0.0
    %101 = vmatpush1.msra.mxu0 0.0
    %102 = vmatprep.subr.mxu0 0.0
    %103 = vmatpush1.msra.mxu0 0.0
    %104 = vmatprep.subr.mxu0 0.0
    %105 = vmatpush1.msra.mxu0 0.0
    %106 = vmatprep.subr.mxu0 0.0
    %107 = vmatpush1.msra.mxu0 0.0
    %108 = vmatprep.subr.mxu0 0.0
    %109 = vmatpush1.msra.mxu0 0.0
    %110 = vmatprep.subr.mxu0 0.0
    %111 = vmatpush1.msra.mxu0 0.0
    %112 = vmatprep.subr.mxu0 0.0
    %113 = vmatpush1.msra.mxu0 0.0
    %114 = vmatprep.subr.mxu0 0.0
    %115 = vmatpush1.msra.mxu0 0.0
    %116 = vmatprep.subr.mxu0 0.0
    %117 = vmatpush1.msra.mxu0 0.0
    %118 = vmatprep.subr.mxu0 0.0
    %119 = vmatpush1.msra.mxu0 0.0
    %120 = vmatprep.subr.mxu0 0.0
    %121 = vmatpush1.msra.mxu0 0.0
    %122 = vmatprep.mubr.f32.mxu0 0.0
    %123 = vmatmul.mubr.f32.gmra.mrb[0].mxu0 %v56
    %v124 = vpop.f32.mrb[0].mxu0
    %v125 = vadd.f32 %v52, %v124
    %v126 = vpop.f32.mrb[0].mxu0
    %127 = vdwg.mxu0
    %128 = vst [vmem:[#allocation7] sm:$0xff] %v125
    // Predicated region
    $region22: #{_fused_linear.1} parent=1 // pred_check
      _
    $region23: #{_fused_linear.1} parent=1 // pred_check_branch
      %130 = sbr.rel (0) target = $region25
    $region24: #{_fused_linear.1} parent=1 // pred_region
      %s132 = ssub.s32 128, 128
      %133 = vsyncadd [#allocation4], %s132
      %s135 = sshll.u32 [#allocation7], 4
      %s136 = int_to_ptr.vmem [resolvable:$true] %s135
      %138 = dma.vmem_to_hbm [thread:$0]  %s136, 128, %s3, [#allocation4]
    $region25: #{_fused_linear.1} parent=1 // pred_fallthru
      _
    // Predicated region
    $region26: #{_fused_linear.1} parent=1 // pred_check
      _
    $region27: #{_fused_linear.1} parent=1 // pred_check_branch
      %140 = sbr.rel (0) target = $region29
    $region28: #{_fused_linear.1} parent=1 // pred_region
      %141 = dma.done [#allocation4], 128
    $region29: #{_fused_linear.1} parent=1 // pred_fallthru
      _
    %142 = vsyncpa [#allocation3], 1
    %143 = vsyncpa [#allocation6], 1
    %144 = vsyncpa [#allocation4], 1

</llo_original>
